<compile_context>
chip_gen: v7x
topology: tpu7x:2x2x1
jax: 0.10.0
libtpu: 0.0.40
codegen_flags: <defaults>
</compile_context>

<pallas_src>
import functools

import jax
import jax.numpy as jnp
from jax.experimental import pallas as pl
from jax.experimental.pallas import tpu as pltpu

# Hyper-parameters mirroring WSLDLoss.__init__ (opt.nce_t=4, cifar10, smoothing=0.0)
T = 4.0
ALPHA = 2.5
N_CLS = 10
LABEL_SMOOTHING = 0.0


def _round_up(x, m):
    return (x + m - 1) // m * m


def wsld_kernel(x_ref, label_ref, loss_ref, *, n_cls, n_valid, block_b):
    """x_ref: [2C, TB] (rows 0..C-1 teacher, C..2C-1 student); label_ref: [1, TB]."""
    C = n_cls
    TB = block_b
    x = x_ref[...].astype(jnp.float32)          # cast on load (inputs may be bf16)
    fc_t = x[:C, :]                              # [C, TB]
    fc_s = x[C:, :]                              # [C, TB]
    label = label_ref[...]                       # [1, TB] int32
    inv_T = 1.0 / T

    # Shared per-sample maxima: max(x / T) == max(x) / T.
    m_s = jnp.max(fc_s, axis=0, keepdims=True)   # [1, TB]
    m_t = jnp.max(fc_t, axis=0, keepdims=True)
    z_s = fc_s - m_s                             # [C, TB], <= 0
    z_t = fc_t - m_t

    # ---- soft (distillation) term, fused ---------------------------------
    z_s_T = z_s * inv_T
    z_t_T = z_t * inv_T
    e_s_T = jnp.exp(z_s_T)                       # EUP
    e_t_T = jnp.exp(z_t_T)                       # EUP
    sum_e_s_T = jnp.sum(e_s_T, axis=0, keepdims=True)   # [1, TB]
    sum_e_t_T = jnp.sum(e_t_T, axis=0, keepdims=True)
    dot_ts = jnp.sum(e_t_T * z_s_T, axis=0, keepdims=True)
    # -sum(softmax(fc_t/T) * log_softmax(fc_s/T)) without [C,TB] temporaries:
    softmax_loss = jnp.log(sum_e_s_T) - dot_ts * pl.reciprocal(sum_e_t_T, approx=True)

    # ---- focal weight from hard CE of student / teacher ------------------
    # T == 4  =>  exp(z) = exp(z/T)^4 : swap 2 big exps for a few vmuls.
    if float(T) == 4.0:
        e_s2 = e_s_T * e_s_T
        e_s = e_s2 * e_s2
        e_t2 = e_t_T * e_t_T
        e_t = e_t2 * e_t2
    else:
        e_s = jnp.exp(z_s)
        e_t = jnp.exp(z_t)
    lse_s = jnp.log(jnp.sum(e_s, axis=0, keepdims=True))   # [1, TB]
    lse_t = jnp.log(jnp.sum(e_t, axis=0, keepdims=True))

    cls_ids = jax.lax.broadcasted_iota(jnp.int32, (C, TB), 0)
    lbl_mask = cls_ids == label                              # [C, TB] bool
    z_s_lbl = jnp.sum(jnp.where(lbl_mask, z_s, 0.0), axis=0, keepdims=True)
    z_t_lbl = jnp.sum(jnp.where(lbl_mask, z_t, 0.0), axis=0, keepdims=True)
    softmax_loss_s = lse_s - z_s_lbl     # = -log_softmax(fc_s)[label]
    softmax_loss_t = lse_t - z_t_lbl     # = -log_softmax(fc_t)[label]

    focal_weight = jnp.maximum(softmax_loss_s / (softmax_loss_t + 1e-07), 0.0)
    focal_weight = 1.0 - jnp.exp(-focal_weight)

    # ---- lane-mask padded tail lanes, reduce to per-block partial --------
    lane = jax.lax.broadcasted_iota(jnp.int32, (1, TB), 1) + pl.program_id(0) * TB
    valid = (lane < n_valid).astype(jnp.float32)             # [1, TB]

    soft_sum = jnp.sum(valid * focal_weight * softmax_loss)
    if LABEL_SMOOTHING == 0.0:
        # smoothing == 0  =>  hard CE is exactly the NLL at the label.
        hard_sum = jnp.sum(valid * softmax_loss_s)
    else:
        log_softmax_s = z_s - lse_s
        soft_target = jnp.where(lbl_mask,
                                1.0 - LABEL_SMOOTHING + LABEL_SMOOTHING / C,
                                LABEL_SMOOTHING / C)
        hard_sum = jnp.sum(valid * jnp.sum(-soft_target * log_softmax_s,
                                           axis=0, keepdims=True))

    # Per-block partial of  sum(hard) + alpha*T^2*sum(soft); /B done in JAX.
    loss_ref[0, 0] = hard_sum + (ALPHA * T * T) * soft_sum


@jax.jit
def wsld_loss(fc_t, fc_s, label):
    """fc_t, fc_s: [B, n_cls] logits (any float dtype); label: [B] int class ids."""
    B, C = fc_s.shape

    TB_MAX = 512
    if B <= TB_MAX:
        TB = _round_up(B, 128)        # single block
    else:
        TB = TB_MAX
    B_pad = _round_up(B, TB)
    num_blocks = B_pad // TB

    # One concat + one relayout: a single lane-dense [2C, B_pad] input stream.
    x = jnp.concatenate([fc_t, fc_s], axis=1).T            # [2C, B], native dtype
    x = jnp.pad(x, ((0, 0), (0, B_pad - B)))
    lbl = jnp.pad(label.astype(jnp.int32), (0, B_pad - B)).reshape(1, B_pad)

    kernel = functools.partial(wsld_kernel, n_cls=C, n_valid=B, block_b=TB)

    partials = pl.pallas_call(
        kernel,
        out_shape=jax.ShapeDtypeStruct((num_blocks, 1), jnp.float32),
        grid=(num_blocks,),
        in_specs=[
            pl.BlockSpec((2 * C, TB), lambda i: (0, i)),
            pl.BlockSpec((1, TB), lambda i: (0, i)),
        ],
        out_specs=pl.BlockSpec((1, 1), lambda i: (i, 0),
                               memory_space=pltpu.MemorySpace.SMEM),
        compiler_params=pltpu.CompilerParams(
            dimension_semantics=("parallel",)),
    )(x, lbl)

    return jnp.sum(partials) / B


def wsld_reference(fc_t, fc_s, label):
    """Pure-JAX reference mirroring the PyTorch forward."""
    fc_t = fc_t.astype(jnp.float32)
    fc_s = fc_s.astype(jnp.float32)
    lsm = jax.nn.log_softmax
    t_soft = jax.nn.softmax(fc_t / T, axis=1)
    softmax_loss = -jnp.sum(t_soft * lsm(fc_s / T, axis=1), axis=1, keepdims=True)
    one_hot = jax.nn.one_hot(label, fc_s.shape[1], dtype=jnp.float32)
    sls = -jnp.sum(one_hot * lsm(fc_s, axis=1), axis=1, keepdims=True)
    slt = -jnp.sum(one_hot * lsm(fc_t, axis=1), axis=1, keepdims=True)
    fw = jnp.maximum(sls / (slt + 1e-07), 0.0)
    fw = 1.0 - jnp.exp(-fw)
    soft_loss = (T ** 2) * jnp.mean(fw * softmax_loss)
    soft_target = one_hot * (1.0 - LABEL_SMOOTHING) + LABEL_SMOOTHING / fc_s.shape[1]
    hard_loss = jnp.mean(jnp.sum(-soft_target * lsm(fc_s, axis=1), axis=1))
    return hard_loss + ALPHA * soft_loss


if __name__ == "__main__":
    key = jax.random.PRNGKey(0)

    # Small case (single block, padded lanes masked).
    k_t, k_s, k_l = jax.random.split(key, 3)
    B = 8
    fc_t = jax.random.normal(k_t, (B, N_CLS), dtype=jnp.float32) * 2.0
    fc_s = jax.random.normal(k_s, (B, N_CLS), dtype=jnp.float32) * 2.0
    label = jax.random.randint(k_l, (B,), 0, N_CLS, dtype=jnp.int32)

    loss = wsld_loss(fc_t, fc_s, label)
    jax.block_until_ready(loss)
    ref = wsld_reference(fc_t, fc_s, label)
    assert loss.shape == () and bool(jnp.isfinite(loss))
    assert jnp.allclose(loss, ref, rtol=1e-2, atol=1e-3), (loss, ref)

    # Multi-block case (exercises the grid + tail-block lane mask).
    k_t2, k_s2, k_l2 = jax.random.split(jax.random.PRNGKey(1), 3)
    B2 = 600
    fc_t2 = jax.random.normal(k_t2, (B2, N_CLS), dtype=jnp.float32) * 2.0
    fc_s2 = jax.random.normal(k_s2, (B2, N_CLS), dtype=jnp.float32) * 2.0
    label2 = jax.random.randint(k_l2, (B2,), 0, N_CLS, dtype=jnp.int32)

    loss2 = wsld_loss(fc_t2, fc_s2, label2)
    jax.block_until_ready(loss2)
    ref2 = wsld_reference(fc_t2, fc_s2, label2)
    assert jnp.allclose(loss2, ref2, rtol=1e-2, atol=1e-3), (loss2, ref2)

    print("KERNEL_OK")
</pallas_src>

<mosaic_0001>
module attributes {stable_mosaic.version = 11 : i64} {
  func.func @wsld_kernel(%arg0: i32, %arg1: memref<20x128xf32, #tpu.memory_space<vmem>>, %arg2: memref<1x128xi32, #tpu.memory_space<vmem>>, %arg3: memref<1x1xf32, #tpu.memory_space<smem>>) attributes {dimension_semantics = [#tpu.dimension_semantics<parallel>], iteration_bounds = array<i64: 1>, scalar_prefetch = 0 : i64, scratch_operands = 0 : i64, tpu.core_type = #tpu.core_type<tc>, window_params = [{transform_indices = @transform_0, window_bounds = array<i64: 20, 128>}, {transform_indices = @transform_1, window_bounds = array<i64: 1, 128>}, {transform_indices = @transform_2, window_bounds = array<i64: 1, 1>}]} {
    %c0 = arith.constant 0 : index
    %c0_0 = arith.constant 0 : index
    %0 = vector.load %arg1[%c0, %c0_0] : memref<20x128xf32, #tpu.memory_space<vmem>>, vector<20x128xf32>
    %1 = vector.extract_strided_slice %0 {offsets = [0, 0], sizes = [10, 128], strides = [1, 1]} : vector<20x128xf32> to vector<10x128xf32>
    %2 = vector.extract_strided_slice %0 {offsets = [10, 0], sizes = [10, 128], strides = [1, 1]} : vector<20x128xf32> to vector<10x128xf32>
    %c0_1 = arith.constant 0 : index
    %c0_2 = arith.constant 0 : index
    %3 = vector.load %arg2[%c0_1, %c0_2] : memref<1x128xi32, #tpu.memory_space<vmem>>, vector<1x128xi32>
    %cst = arith.constant dense<0xFF800000> : vector<128xf32>
    %4 = vector.multi_reduction <maximumf>, %2, %cst [0] : vector<10x128xf32> to vector<128xf32>
    %5 = vector.shape_cast %4 : vector<128xf32> to vector<1x128xf32>
    %cst_3 = arith.constant dense<0xFF800000> : vector<128xf32>
    %6 = vector.multi_reduction <maximumf>, %1, %cst_3 [0] : vector<10x128xf32> to vector<128xf32>
    %7 = vector.shape_cast %6 : vector<128xf32> to vector<1x128xf32>
    %8 = vector.broadcast %5 : vector<1x128xf32> to vector<10x128xf32>
    %9 = arith.subf %2, %8 : vector<10x128xf32>
    %10 = vector.broadcast %7 : vector<1x128xf32> to vector<10x128xf32>
    %11 = arith.subf %1, %10 : vector<10x128xf32>
    %cst_4 = arith.constant 2.500000e-01 : f32
    %12 = vector.broadcast %cst_4 : f32 to vector<10x128xf32>
    %13 = arith.mulf %9, %12 : vector<10x128xf32>
    %cst_5 = arith.constant 2.500000e-01 : f32
    %14 = vector.broadcast %cst_5 : f32 to vector<10x128xf32>
    %15 = arith.mulf %11, %14 : vector<10x128xf32>
    %16 = math.exp %13 : vector<10x128xf32>
    %17 = math.exp %15 : vector<10x128xf32>
    %cst_6 = arith.constant dense<0.000000e+00> : vector<128xf32>
    %18 = vector.multi_reduction <add>, %16, %cst_6 [0] : vector<10x128xf32> to vector<128xf32>
    %19 = vector.shape_cast %18 : vector<128xf32> to vector<1x128xf32>
    %cst_7 = arith.constant dense<0.000000e+00> : vector<128xf32>
    %20 = vector.multi_reduction <add>, %17, %cst_7 [0] : vector<10x128xf32> to vector<128xf32>
    %21 = vector.shape_cast %20 : vector<128xf32> to vector<1x128xf32>
    %22 = arith.mulf %17, %13 : vector<10x128xf32>
    %cst_8 = arith.constant dense<0.000000e+00> : vector<128xf32>
    %23 = vector.multi_reduction <add>, %22, %cst_8 [0] : vector<10x128xf32> to vector<128xf32>
    %24 = vector.shape_cast %23 : vector<128xf32> to vector<1x128xf32>
    %25 = math.log %19 : vector<1x128xf32>
    %26 = tpu.reciprocal %21 {approx = true} : vector<1x128xf32> -> vector<1x128xf32>
    %27 = arith.mulf %24, %26 : vector<1x128xf32>
    %28 = arith.subf %25, %27 : vector<1x128xf32>
    %29 = arith.mulf %16, %16 : vector<10x128xf32>
    %30 = arith.mulf %29, %29 : vector<10x128xf32>
    %31 = arith.mulf %17, %17 : vector<10x128xf32>
    %32 = arith.mulf %31, %31 : vector<10x128xf32>
    %cst_9 = arith.constant dense<0.000000e+00> : vector<128xf32>
    %33 = vector.multi_reduction <add>, %30, %cst_9 [0] : vector<10x128xf32> to vector<128xf32>
    %34 = vector.shape_cast %33 : vector<128xf32> to vector<1x128xf32>
    %35 = math.log %34 : vector<1x128xf32>
    %cst_10 = arith.constant dense<0.000000e+00> : vector<128xf32>
    %36 = vector.multi_reduction <add>, %32, %cst_10 [0] : vector<10x128xf32> to vector<128xf32>
    %37 = vector.shape_cast %36 : vector<128xf32> to vector<1x128xf32>
    %38 = math.log %37 : vector<1x128xf32>
    %39 = tpu.iota {dimensions = array<i32: 0>} : vector<10x128xi32>
    %40 = vector.broadcast %3 : vector<1x128xi32> to vector<10x128xi32>
    %41 = arith.cmpi eq, %39, %40 : vector<10x128xi32>
    %cst_11 = arith.constant 0.000000e+00 : f32
    %42 = vector.broadcast %cst_11 : f32 to vector<10x128xf32>
    %43 = arith.select %41, %9, %42 : vector<10x128xi1>, vector<10x128xf32>
    %cst_12 = arith.constant dense<0.000000e+00> : vector<128xf32>
    %44 = vector.multi_reduction <add>, %43, %cst_12 [0] : vector<10x128xf32> to vector<128xf32>
    %45 = vector.shape_cast %44 : vector<128xf32> to vector<1x128xf32>
    %cst_13 = arith.constant 0.000000e+00 : f32
    %46 = vector.broadcast %cst_13 : f32 to vector<10x128xf32>
    %47 = arith.select %41, %11, %46 : vector<10x128xi1>, vector<10x128xf32>
    %cst_14 = arith.constant dense<0.000000e+00> : vector<128xf32>
    %48 = vector.multi_reduction <add>, %47, %cst_14 [0] : vector<10x128xf32> to vector<128xf32>
    %49 = vector.shape_cast %48 : vector<128xf32> to vector<1x128xf32>
    %50 = arith.subf %35, %45 : vector<1x128xf32>
    %51 = arith.subf %38, %49 : vector<1x128xf32>
    %cst_15 = arith.constant 1.000000e-07 : f32
    %52 = vector.broadcast %cst_15 : f32 to vector<1x128xf32>
    %53 = arith.addf %51, %52 : vector<1x128xf32>
    %54 = arith.divf %50, %53 : vector<1x128xf32>
    %cst_16 = arith.constant 0.000000e+00 : f32
    %55 = vector.broadcast %cst_16 : f32 to vector<1x128xf32>
    %56 = arith.maximumf %54, %55 : vector<1x128xf32>
    %cst_17 = arith.constant 0.000000e+00 : f32
    %57 = vector.broadcast %cst_17 : f32 to vector<1x128xf32>
    %58 = arith.subf %57, %56 : vector<1x128xf32>
    %59 = math.exp %58 : vector<1x128xf32>
    %cst_18 = arith.constant 1.000000e+00 : f32
    %60 = vector.broadcast %cst_18 : f32 to vector<1x128xf32>
    %61 = arith.subf %60, %59 : vector<1x128xf32>
    %62 = tpu.iota {dimensions = array<i32: 1>} : vector<1x128xi32>
    %c128_i32 = arith.constant 128 : i32
    %63 = arith.muli %arg0, %c128_i32 : i32
    %64 = vector.broadcast %63 : i32 to vector<1x128xi32>
    %65 = arith.addi %62, %64 : vector<1x128xi32>
    %c8_i32 = arith.constant 8 : i32
    %66 = vector.broadcast %c8_i32 : i32 to vector<1x128xi32>
    %67 = arith.cmpi slt, %65, %66 : vector<1x128xi32>
    %68 = arith.extui %67 : vector<1x128xi1> to vector<1x128xi32>
    %69 = arith.sitofp %68 : vector<1x128xi32> to vector<1x128xf32>
    %70 = arith.mulf %69, %61 : vector<1x128xf32>
    %71 = arith.mulf %70, %28 : vector<1x128xf32>
    %72 = vector.shape_cast %71 : vector<1x128xf32> to vector<1x1x128xf32>
    %cst_19 = arith.constant dense<0.000000e+00> : vector<1xf32>
    %73 = vector.multi_reduction <add>, %72, %cst_19 [1, 2] : vector<1x1x128xf32> to vector<1xf32>
    %74 = vector.shape_cast %73 : vector<1xf32> to vector<1x1x1xf32>
    %75 = vector.extract %74[0, 0, 0] : f32 from vector<1x1x1xf32>
    %76 = arith.mulf %69, %50 : vector<1x128xf32>
    %77 = vector.shape_cast %76 : vector<1x128xf32> to vector<1x1x128xf32>
    %cst_20 = arith.constant dense<0.000000e+00> : vector<1xf32>
    %78 = vector.multi_reduction <add>, %77, %cst_20 [1, 2] : vector<1x1x128xf32> to vector<1xf32>
    %79 = vector.shape_cast %78 : vector<1xf32> to vector<1x1x1xf32>
    %80 = vector.extract %79[0, 0, 0] : f32 from vector<1x1x1xf32>
    %cst_21 = arith.constant 4.000000e+01 : f32
    %81 = arith.mulf %cst_21, %75 : f32
    %82 = arith.addf %80, %81 : f32
    %c0_22 = arith.constant 0 : index
    %c0_23 = arith.constant 0 : index
    %83 = memref.load %arg3[%c0_22, %c0_23] : memref<1x1xf32, #tpu.memory_space<smem>>
    memref.store %82, %arg3[%c0_22, %c0_23] : memref<1x1xf32, #tpu.memory_space<smem>>
    return
  }
  func.func @transform_0(%arg0: i32) -> (i32, i32) {
    %c0_i32 = arith.constant 0 : i32
    %c0_i32_0 = arith.constant 0 : i32
    return %c0_i32, %arg0 : i32, i32
  }
  func.func @transform_1(%arg0: i32) -> (i32, i32) {
    %c0_i32 = arith.constant 0 : i32
    %c0_i32_0 = arith.constant 0 : i32
    return %c0_i32, %arg0 : i32, i32
  }
  func.func @transform_2(%arg0: i32) -> (i32, i32) {
    %c0_i32 = arith.constant 0 : i32
    %c0_i32_0 = arith.constant 0 : i32
    return %arg0, %c0_i32 : i32, i32
  }
}

</mosaic_0001>

<llo_original>
// kernel: wsld_loss.1
$region0: #{wsld_loss.1}
  #allocation0 [shape = 'u32[]', space=smem, size = 0x4, offset = 0x4, fixed_abs, tag = 'smem constant byte address 0x4 - core index']
  #allocation1 [shape = 'u32[144,128]{1,0:T(1,128)}', space=vmem, size = 0x12000, scoped, tag = 'internal scratch']
  %s0 = inlined_call_operand.vmem [shape: f32[20,128], index: 0, kind: input, shape index: {}]
  %s1 = inlined_call_operand.vmem [shape: s32[1,128], index: 1, kind: input, shape index: {}]
  %s2 = inlined_call_operand.hbm [shape: f32[1,1], index: 2, kind: output, shape index: {}]
  %s3 = sld [smem:[#allocation0]]
  $region18: #{wsld_loss.1} parent=0
    _
  %s5 = ssub.s32 1, %s3
  %s6 = scalar_select 0, %s5, %s3
  $region1: #{wsld_loss.1} parent=0
    #allocation2 [shape = 'u8[512]{0}', space=smem, size = 0x200, scoped, tag = 'output window, operand 0, single buffered']
    #allocation3 [shape = 's32[1]{0}', space=sflag, size = 0x4, scoped, tag = 'scoped memory for wsld_loss.1']
    %7 = vsyncpa [#allocation3], 0
    // Predicated region
    $region2: #{wsld_loss.1} parent=1 // pred_check
      _
    $region3: #{wsld_loss.1} parent=1 // pred_check_branch
      %9 = sbr.rel (0) target = $region5
    $region4: #{wsld_loss.1} parent=1 // pred_region
      _
    $region5: #{wsld_loss.1} parent=1 // pred_fallthru
      _
    // Predicated region
    $region6: #{wsld_loss.1} parent=1 // pred_check
      _
    $region7: #{wsld_loss.1} parent=1 // pred_check_branch
      %11 = sbr.rel (0) target = $region9
    $region8: #{wsld_loss.1} parent=1 // pred_region
      _
    $region9: #{wsld_loss.1} parent=1 // pred_fallthru
      _
    %v12 = vld [vmem:[%s0] sm:$0xff]
    %v13 = vld [vmem:[%s0 + $0x8] sm:$0xff]
    %v14 = vld [vmem:[%s0 + $0x10] sm:$0xf]
    %v15 = vld [vmem:[%s1] sm:$0x1]
    %vm16 = vcmask 1047554
    %v17 = vsel %vm16, %v13, -inf
    %vm18 = vcmask 1043456
    %v19 = vsel %vm18, %v14, -inf
    %v20 = vmax.f32 %v17, %v19
    %v21 = vrot.slane %v20, 4
    %v22 = vmax.f32 %v20, %v21
    %v23 = vrot.slane %v22, 2
    %v24 = vmax.f32 %v22, %v23
    %v25 = vrot.slane %v24, 1
    %v26 = vmax.f32 %v24, %v25
    %vm27 = vcmask 1041408
    %v28 = vsel %vm27, %v13, -inf
    %v29 = vmax.f32 %v12, %v28
    %v30 = vrot.slane %v29, 4
    %v31 = vmax.f32 %v29, %v30
    %v32 = vrot.slane %v31, 2
    %v33 = vmax.f32 %v31, %v32
    %v34 = vrot.slane %v33, 1
    %v35 = vmax.f32 %v33, %v34
    %v36 = vsub.f32 %v13, %v26
    %v37 = vsub.f32 %v14, %v26
    %v38 = vsub.f32 %v12, %v35
    %v39 = vsub.f32 %v13, %v35
    %v40 = vmul.f32 %v36, 0.25
    %v41 = vmul.f32 %v37, 0.25
    %v42 = vmul.f32 %v38, 0.25
    %v43 = vmul.f32 %v39, 0.25
    %v44 = vmul.f32 %v40, 1.442695
    %v45 = vpow.pop %v44
    %v46 = vmul.f32 %v41, 1.442695
    %v47 = vpow.pop %v46
    %v48 = vmul.f32 %v42, 1.442695
    %v49 = vpow.pop %v48
    %v50 = vmul.f32 %v43, 1.442695
    %v51 = vpow.pop %v50
    %vm54 = vcmask 1045504
    %v55 = vrot.slane %v45, 2
    %v56 = vrot.slane %v47, 2
    %v57 = vsel %vm54, %v55, %v56
    %v60 = vsel %vm27, %v56, 0.0
    %v61 = vadd.f32 %v57, %v60
    %v62 = vrot.slane %v61, 4
    %v63 = vadd.f32 %v61, %v62
    %v64 = vrot.slane %v63, 2
    %v65 = vadd.f32 %v63, %v64
    %v66 = vrot.slane %v65, 1
    %v67 = vadd.f32 %v65, %v66
    %v68 = vsel %vm27, %v51, 0.0
    %v69 = vadd.f32 %v49, %v68
    %v70 = vrot.slane %v69, 4
    %v71 = vadd.f32 %v69, %v70
    %v72 = vrot.slane %v71, 2
    %v73 = vadd.f32 %v71, %v72
    %v74 = vrot.slane %v73, 1
    %v75 = vadd.f32 %v73, %v74
    %v78 = vrot.slane %v40, 2
    %v79 = vrot.slane %v41, 2
    %v80 = vsel %vm54, %v78, %v79
    %v83 = vmul.f32 %v49, %v80
    %v84 = vmul.f32 %v51, %v79
    %v85 = vsel %vm27, %v84, 0.0
    %v86 = vadd.f32 %v83, %v85
    %v87 = vrot.slane %v86, 4
    %v88 = vadd.f32 %v86, %v87
    %v89 = vrot.slane %v88, 2
    %v90 = vadd.f32 %v88, %v89
    %v91 = vrot.slane %v90, 1
    %v92 = vadd.f32 %v90, %v91
    %v93 = vlog2.pop %v67
    %v94 = vmul.f32 %v93, 0.6931472
    %v95 = vrcp.pop %v75
    %v96 = vmul.f32 %v92, %v95
    %v97 = vsub.f32 %v94, %v96
    %v98 = vmul.f32 %v45, %v45
    %v99 = vmul.f32 %v47, %v47
    %v100 = vmul.f32 %v98, %v98
    %v101 = vmul.f32 %v99, %v99
    %v102 = vmul.f32 %v49, %v49
    %v103 = vmul.f32 %v51, %v51
    %v104 = vmul.f32 %v102, %v102
    %v105 = vmul.f32 %v103, %v103
    %v108 = vrot.slane %v100, 2
    %v109 = vrot.slane %v101, 2
    %v110 = vsel %vm54, %v108, %v109
    %v113 = vsel %vm27, %v109, 0.0
    %v114 = vadd.f32 %v110, %v113
    %v115 = vrot.slane %v114, 4
    %v116 = vadd.f32 %v114, %v115
    %v117 = vrot.slane %v116, 2
    %v118 = vadd.f32 %v116, %v117
    %v119 = vrot.slane %v118, 1
    %v120 = vadd.f32 %v118, %v119
    %v121 = vlog2.pop %v120
    %v122 = vmul.f32 %v121, 0.6931472
    %v123 = vsel %vm27, %v105, 0.0
    %v124 = vadd.f32 %v104, %v123
    %v125 = vrot.slane %v124, 4
    %v126 = vadd.f32 %v124, %v125
    %v127 = vrot.slane %v126, 2
    %v128 = vadd.f32 %v126, %v127
    %v129 = vrot.slane %v128, 1
    %v130 = vadd.f32 %v128, %v129
    %v131 = vlog2.pop %v130
    %v132 = vmul.f32 %v131, 0.6931472
    %v133 = vlaneseq
    %v134 = vshrl.u32 %v133, 7
    %v135 = vadd.s32 %v134, 8
    %v136 = vlaneseq
    %v137 = vshrl.u32 %v136, 7
    %v138 = vsub.s32 0, %v137
    %v139 = vrot.slane %v15, %v138
    %vm140 = vcmp.eq.s32.totalorder %v134, %v139
    %vm141 = vcmp.eq.s32.totalorder %v135, %v139
    %v144 = vrot.slane %v36, 2
    %v145 = vrot.slane %v37, 2
    %v146 = vsel %vm54, %v144, %v145
    %v149 = vsel %vm140, %v146, 0.0
    %v150 = vsel %vm141, %v145, 0.0
    %v151 = vsel %vm27, %v150, 0.0
    %v152 = vadd.f32 %v149, %v151
    %v153 = vrot.slane %v152, 4
    %v154 = vadd.f32 %v152, %v153
    %v155 = vrot.slane %v154, 2
    %v156 = vadd.f32 %v154, %v155
    %v157 = vrot.slane %v156, 1
    %v158 = vadd.f32 %v156, %v157
    %v159 = vsel %vm140, %v38, 0.0
    %v160 = vsel %vm141, %v39, 0.0
    %v161 = vsel %vm27, %v160, 0.0
    %v162 = vadd.f32 %v159, %v161
    %v163 = vrot.slane %v162, 4
    %v164 = vadd.f32 %v162, %v163
    %v165 = vrot.slane %v164, 2
    %v166 = vadd.f32 %v164, %v165
    %v167 = vrot.slane %v166, 1
    %v168 = vadd.f32 %v166, %v167
    %v169 = vsub.f32 %v122, %v158
    %v170 = vsub.f32 %v132, %v168
    %v171 = vadd.f32 %v170, 1e-07
    %v172 = vrcp.pop %v171
    %v173 = vmul.f32 %v169, %v172
    %v174 = vmax.f32 %v173, 0.0
    %v175 = vsub.f32 0.0, %v174
    %v176 = vmul.f32 %v175, 1.442695
    %v177 = vpow.pop %v176
    %v178 = vsub.f32 1.0, %v177
    %v179 = vlaneseq
    %v180 = vand.u32 %v179, 127
    %s181 = smul.u32 0, 128
    %v182 = vstv %s181
    %v183 = vadd.s32 %v180, %v182
    %vm184 = vcmp.lt.s32.totalorder %v183, 8
    %v185 = vsel %vm184, 1, 0
    %v186 = vcvt.s32.f32 %v185
    %v187 = vmul.f32 %v186, %v178
    %v188 = vmul.f32 %v187, %v97
    %vm189 = vcmask 1040384
    %v190 = vsel %vm189, %v188, 0.0
    %191 = vadd.xlane.f32.xlu0 %v190
    %v192 = vpop.xlane.xlu0 %191
    %v193 = vrot.slane %v192, 4
    %v194 = vadd.f32 %v192, %v193
    %v195 = vrot.slane %v194, 2
    %v196 = vadd.f32 %v194, %v195
    %v197 = vrot.slane %v196, 1
    %v198 = vadd.f32 %v196, %v197
    %s199 = vtos %v198
    %v200 = vmul.f32 %v186, %v169
    %v201 = vsel %vm189, %v200, 0.0
    %202 = vadd.xlane.f32.xlu0 %v201
    %v203 = vpop.xlane.xlu0 %202
    %v204 = vrot.slane %v203, 4
    %v205 = vadd.f32 %v203, %v204
    %v206 = vrot.slane %v205, 2
    %v207 = vadd.f32 %v205, %v206
    %v208 = vrot.slane %v207, 1
    %v209 = vadd.f32 %v207, %v208
    %s210 = vtos %v209
    %s211 = smul.f32 %s199, 40.0
    %s212 = sadd.f32 %s210, %s211
    %s213 = scalar_lea.smem [#allocation2], 0
    %214 = sst [smem:[%s213]] %s212
    // Predicated region
    $region10: #{wsld_loss.1} parent=1 // pred_check
      _
    $region11: #{wsld_loss.1} parent=1 // pred_check_branch
      %216 = sbr.rel (0) target = $region13
    $region12: #{wsld_loss.1} parent=1 // pred_region
      %s218 = ssub.s32 16, 16
      %219 = vsyncadd [#allocation3], %s218
      %222 = dma.smem_to_hbm [#allocation2], 16, %s2, [#allocation3]
    $region13: #{wsld_loss.1} parent=1 // pred_fallthru
      _
    // Predicated region
    $region14: #{wsld_loss.1} parent=1 // pred_check
      _
    $region15: #{wsld_loss.1} parent=1 // pred_check_branch
      %224 = sbr.rel (0) target = $region17
    $region16: #{wsld_loss.1} parent=1 // pred_region
      %225 = dma.done [#allocation3], 16
    $region17: #{wsld_loss.1} parent=1 // pred_fallthru
      _
    %226 = sfence
    %227 = vsyncpa [#allocation3], 1

</llo_original>
